<compile_context>
chip_gen: v5e
topology: v5e:2x2
jax: 0.10.0
libtpu: 0.0.40
codegen_flags: <defaults>
</compile_context>

<pallas_src>
import functools

import jax
import jax.numpy as jnp
from jax import lax
from jax.experimental import pallas as pl
from jax.experimental.pallas import tpu as pltpu


def _elu(x, alpha):
    # exp always in f32 (v5e EUP has no bf16); result cast back to operand
    # dtype so bf16 operands would keep feeding the MXU as bf16.
    xf = x.astype(jnp.float32)
    return jnp.where(xf > 0, xf, alpha * (jnp.exp(xf) - 1.0)).astype(x.dtype)


def _resblock_kernel(x_ref, xl_ref, xr_ref, w1_ref, b1_ref, w2_ref, b2_ref,
                     wsc_ref, o_ref, *, tile_t, cin, chid, dil, alpha,
                     use_shortcut, fuse_taps):
    # x_ref : (1, TILE_T, Cin)  input rows of this time tile
    # xl_ref: (1, 8, Cin)       the 8 rows just before the tile (clamped)
    # xr_ref: (1, 8, Cin)       the 8 rows just after the tile (clamped)
    # w1_ref: (3*Cin, Chid)     dilated k=3 conv weights, 2-D lane-dense slab
    # b1_ref: (1, Chid)
    # w2_ref: (Chid, Cout)      1x1 conv
    # b2_ref: (1, Cout)         conv-2 bias (+ folded shortcut bias)
    # wsc_ref:(Cin, Cout)       1x1 shortcut conv (true_skip=False path)
    # o_ref : (1, TILE_T, Cout)
    i = pl.program_id(1)
    n_t = pl.num_programs(1)
    d = dil

    x_tile = x_ref[0]                                   # (TILE_T, Cin)
    e = _elu(x_tile, alpha)                             # ELU #1, unshifted tile

    # ---- halo activations (d rows each); reflection only at global edges ----
    lh = _elu(xl_ref[0, 8 - d:, :], alpha)              # rows a[t0-d : t0]
    l_refl = _elu(jnp.concatenate(
        [x_tile[j:j + 1, :] for j in range(d, 0, -1)], axis=0), alpha)
    left = jnp.where(i == 0, l_refl, lh)

    rh = _elu(xr_ref[0, :d, :], alpha)                  # rows a[t0+T : t0+T+d]
    r_refl = _elu(jnp.concatenate(
        [x_tile[tile_t - 2 - j:tile_t - 1 - j, :] for j in range(d)], axis=0),
        alpha)
    right = jnp.where(i == n_t - 1, r_refl, rh)

    # shifted operands of the dilated k=3 conv: a[t-d] and a[t+d]
    op0 = jnp.concatenate([left, e[:tile_t - d, :]], axis=0)   # (TILE_T, Cin)
    op2 = jnp.concatenate([e[d:, :], right], axis=0)           # (TILE_T, Cin)

    if fuse_taps:
        # single K=3*Cin matmul: better MXU contraction fill when Cin is small.
        op = jnp.concatenate([op0, e, op2], axis=1)            # (TILE_T, 3*Cin)
        h = jnp.dot(op, w1_ref[...], preferred_element_type=jnp.float32)
    else:
        # clean accumulation chain (in-place MRB accumulate on v7x).
        h = jnp.dot(op0, w1_ref[0:cin, :], preferred_element_type=jnp.float32)
        h = h + jnp.dot(e, w1_ref[cin:2 * cin, :],
                        preferred_element_type=jnp.float32)
        h = h + jnp.dot(op2, w1_ref[2 * cin:3 * cin, :],
                        preferred_element_type=jnp.float32)
    h = h + b1_ref[...].astype(jnp.float32)

    # ELU #2 then 1x1 conv; shortcut 1x1 accumulates into the same f32 result.
    h_act = _elu(h, alpha).astype(w2_ref.dtype)
    out = jnp.dot(h_act, w2_ref[...], preferred_element_type=jnp.float32)
    if use_shortcut:  # true_skip=False (SEANetDecoder default)
        out = out + jnp.dot(x_tile, wsc_ref[...],
                            preferred_element_type=jnp.float32)
    out = out + b2_ref[...].astype(jnp.float32)

    o_ref[0] = out.astype(o_ref.dtype)


def _auto_tile(T, B, C, chid, itemsize, d):
    """Pick tile_t (multiple of 8) and vmem_limit_bytes per TPU generation."""
    min_tile = 8 if d < 8 else 16
    try:
        info = pltpu.get_tpu_info()
        vmem_cap = int(getattr(info, "vmem_capacity_bytes", 128 << 20))
    except Exception:  # no TPU visible at trace time -> conservative default
        vmem_cap = 128 << 20
    # leave headroom: v7x (64 MiB) -> 48 MiB, v5e/v6e (128 MiB) -> 96 MiB.
    vmem_limit = int(min(vmem_cap * 3 // 4, 96 << 20))
    # target ~2-4 MiB of input rows per block (per-step overhead amortization).
    target_block = (4 << 20) if vmem_cap >= (96 << 20) else (2 << 20)
    rows = (target_block // (max(C, 128) * itemsize)) // 8 * 8

    # conservative live-VMEM cap: double-buffered in/out tiles + resident
    # weights + f32 intermediates (e, two shifted operands, h, h_act, out).
    weight_bytes = itemsize * (3 * C * chid + chid * C + C * C) + 4 * (C + chid)
    per_row = 4 * C * itemsize + 4 * (5 * C + 2 * chid)
    budget = int(vmem_limit * 0.7) - weight_bytes
    cap_rows = max(min_tile, (budget // max(per_row, 1)) // 8 * 8)
    rows = max(min_tile, min(rows, cap_rows))

    t8 = pl.cdiv(T, 8) * 8
    rows = min(rows, t8)
    # keep at least 2 grid steps when B == 1 so both v7x TensorCores get work.
    if B == 1 and rows >= t8 and t8 > min_tile:
        rows = max(min_tile, ((t8 // 2) // 8) * 8)
    return max(rows, min_tile), vmem_limit


def seanet_resnet_block(x, w1, b1, w2, b2, wsc=None, bsc=None, *,
                        dilation=1, alpha=1.0, true_skip=False, tile_t=None,
                        fuse_taps=None):
    """Fused SEANetResnetBlock forward.

    x   : (B, T, C) channels-last (== PyTorch (B, C, T) input .transpose(1, 2)).
    w1  : (3, C, Chid)  k=3 dilated conv weights (tap, in, out)
    b1  : (Chid,)
    w2  : (Chid, C)     1x1 conv
    b2  : (C,)
    wsc : (C, C)        1x1 shortcut conv (required when true_skip=False)
    bsc : (C,)
    Returns (B, T, C).
    """
    B, T, C = x.shape
    chid = w1.shape[-1]
    assert w1.shape == (3, C, chid)
    assert w2.shape == (chid, C) and b1.shape == (chid,) and b2.shape == (C,)
    d = int(dilation)
    assert 1 <= d <= 8, "halo window supports dilation <= 8"
    assert T > d, "reflect padding needs T > dilation"

    use_shortcut = not true_skip
    if use_shortcut:
        if wsc is None or bsc is None:
            raise ValueError("true_skip=False requires wsc and bsc (the 1x1 "
                             "shortcut conv parameters)")
        assert wsc.shape == (C, C) and bsc.shape == (C,)
    else:
        wsc = jnp.zeros((C, C), x.dtype)  # unused (compiled out of the kernel)

    itemsize = x.dtype.itemsize
    if tile_t is None:
        tile_t, vmem_limit = _auto_tile(T, B, C, chid, itemsize, d)
    else:
        _, vmem_limit = _auto_tile(T, B, C, chid, itemsize, d)
        tile_t = int(tile_t)
    assert tile_t % 8 == 0 and tile_t >= d + 1

    # ---- pad T up to a tile multiple; pad >= d keeps boundary taps exact ----
    n_t = pl.cdiv(T, tile_t)
    pad = n_t * tile_t - T
    if 0 < pad < d:
        n_t += 1
        pad += tile_t
    if pad:
        r1 = min(pad, T - 1)          # genuine reflect rows (>= d since T > d)
        x_in = jnp.pad(x, ((0, 0), (0, r1), (0, 0)), mode="reflect")
        if pad > r1:                  # only feeds discarded rows; keep finite
            x_in = jnp.pad(x_in, ((0, 0), (0, pad - r1), (0, 0)), mode="edge")
    else:
        x_in = x
    t_pad = T + pad
    hblk = tile_t // 8                # tile length in 8-row halo blocks
    n8 = t_pad // 8

    if fuse_taps is None:
        fuse_taps = C <= 128          # single K=3*Cin matmul for small Cin

    w1_2d = w1.reshape(3 * C, chid)   # lane-dense 2-D weight slab
    b1_2d = b1.reshape(1, chid)
    b2c = (b2 + bsc) if use_shortcut else b2   # fold shortcut bias
    b2_2d = b2c.reshape(1, C)

    kernel = functools.partial(
        _resblock_kernel, tile_t=tile_t, cin=C, chid=chid, dil=d, alpha=alpha,
        use_shortcut=use_shortcut, fuse_taps=bool(fuse_taps))

    cost = pl.CostEstimate(
        flops=2 * B * t_pad * (3 * C * chid + chid * C
                               + (C * C if use_shortcut else 0)),
        transcendentals=B * t_pad * (C + chid),
        bytes_accessed=itemsize * (2 * B * t_pad * C
                                   + 3 * C * chid + chid * C + C * C)
        + 4 * (C + chid),
    )

    grid_spec = pltpu.PrefetchScalarGridSpec(
        num_scalar_prefetch=0,
        grid=(B, n_t),
        in_specs=[
            # current tile: rows [i*tile_t, (i+1)*tile_t)
            pl.BlockSpec((1, tile_t, C), lambda b, i: (b, i, 0)),
            # left halo: the 8 rows just before the tile (clamped at t=0)
            pl.BlockSpec((1, 8, C),
                         lambda b, i: (b, jnp.maximum(i * hblk - 1, 0), 0)),
            # right halo: the 8 rows just after the tile (clamped at the end)
            pl.BlockSpec((1, 8, C),
                         lambda b, i: (b, jnp.minimum((i + 1) * hblk, n8 - 1), 0)),
            # weights / biases: constant index_map -> resident in VMEM
            pl.BlockSpec((3 * C, chid), lambda b, i: (0, 0)),
            pl.BlockSpec((1, chid), lambda b, i: (0, 0)),
            pl.BlockSpec((chid, C), lambda b, i: (0, 0)),
            pl.BlockSpec((1, C), lambda b, i: (0, 0)),
            pl.BlockSpec((C, C), lambda b, i: (0, 0)),
        ],
        out_specs=pl.BlockSpec((1, tile_t, C), lambda b, i: (b, i, 0)),
    )

    y = pl.pallas_call(
        kernel,
        out_shape=jax.ShapeDtypeStruct((B, t_pad, C), x.dtype),
        grid_spec=grid_spec,
        compiler_params=pltpu.CompilerParams(
            dimension_semantics=("parallel", "parallel"),
            vmem_limit_bytes=int(vmem_limit)),
        cost_estimate=cost,
    )(x_in, x_in, x_in, w1_2d, b1_2d, w2, b2_2d, wsc)

    return y[:, :T, :]


# ----------------------------- pure-JAX reference -----------------------------

def _elu_ref(x, alpha=1.0):
    xf = x.astype(jnp.float32)
    return jnp.where(xf > 0, xf, alpha * (jnp.exp(xf) - 1.0)).astype(x.dtype)


def _reference(x, w1, b1, w2, b2, wsc, bsc, *, dilation=1, alpha=1.0,
               true_skip=False):
    d = dilation
    a = _elu_ref(x, alpha)
    a = jnp.pad(a, ((0, 0), (d, d), (0, 0)), mode="reflect")
    dn = lax.conv_dimension_numbers(a.shape, w1.shape, ("NWC", "WIO", "NWC"))
    h = lax.conv_general_dilated(a, w1, window_strides=(1,), padding="VALID",
                                 rhs_dilation=(d,), dimension_numbers=dn)
    h = h + b1.reshape(1, 1, -1)
    h = _elu_ref(h, alpha)
    o = jnp.einsum("btc,cd->btd", h, w2) + b2.reshape(1, 1, -1)
    if not true_skip:
        o = o + jnp.einsum("btc,cd->btd", x, wsc) + bsc.reshape(1, 1, -1)
    return o


if __name__ == "__main__":
    # Small shapes consistent with the module: dim=8 -> hidden=dim//compress=4.
    B, dim, T = 2, 8, 50            # T deliberately not a multiple of 8
    hidden = dim // 2

    key = jax.random.PRNGKey(0)
    kx, kw1, kb1, kw2, kb2, kws, kbs, kx2 = jax.random.split(key, 8)

    x = jax.random.normal(kx, (B, T, dim), dtype=jnp.float32)   # channels-last
    # weight_norm at init == plain conv weights.
    w1 = 0.2 * jax.random.normal(kw1, (3, dim, hidden), dtype=jnp.float32)
    b1 = 0.2 * jax.random.normal(kb1, (hidden,), dtype=jnp.float32)
    w2 = 0.2 * jax.random.normal(kw2, (hidden, dim), dtype=jnp.float32)
    b2 = 0.2 * jax.random.normal(kb2, (dim,), dtype=jnp.float32)
    wsc = 0.2 * jax.random.normal(kws, (dim, dim), dtype=jnp.float32)
    bsc = 0.2 * jax.random.normal(kbs, (dim,), dtype=jnp.float32)

    configs = [
        dict(dilation=1, true_skip=False, tile_t=16),                 # ragged T, multi-tile
        dict(dilation=2, true_skip=False, tile_t=8, fuse_taps=False), # unfused 3-dot taps
        dict(dilation=1, true_skip=True, tile_t=None),                # auto tile, single tile
    ]
    for cfg in configs:
        y = seanet_resnet_block(x, w1, b1, w2, b2, wsc, bsc, **cfg)
        y = jax.block_until_ready(y)
        y_ref = _reference(x, w1, b1, w2, b2, wsc, bsc,
                           dilation=cfg["dilation"], true_skip=cfg["true_skip"])
        assert y.shape == (B, T, dim)
        assert jnp.allclose(y, y_ref, atol=1e-4, rtol=1e-4), f"mismatch: {cfg}"

    # exercise the 0 < pad < d bump path: T=63, tile_t=16, dilation=4 -> pad=1.
    T2 = 63
    x2 = jax.random.normal(kx2, (B, T2, dim), dtype=jnp.float32)
    y2 = seanet_resnet_block(x2, w1, b1, w2, b2, wsc, bsc,
                             dilation=4, true_skip=False, tile_t=16)
    y2 = jax.block_until_ready(y2)
    y2_ref = _reference(x2, w1, b1, w2, b2, wsc, bsc,
                        dilation=4, true_skip=False)
    assert y2.shape == (B, T2, dim)
    assert jnp.allclose(y2, y2_ref, atol=1e-4, rtol=1e-4), "mismatch: bump cfg"

    print("KERNEL_OK")
</pallas_src>

<mosaic_0001>
module attributes {stable_mosaic.version = 11 : i64} {
  func.func @_resblock_kernel(%arg0: i32, %arg1: i32, %arg2: memref<1x16x8xf32, #tpu.memory_space<vmem>>, %arg3: memref<1x8x8xf32, #tpu.memory_space<vmem>>, %arg4: memref<1x8x8xf32, #tpu.memory_space<vmem>>, %arg5: memref<24x4xf32, #tpu.memory_space<vmem>>, %arg6: memref<1x4xf32, #tpu.memory_space<vmem>>, %arg7: memref<4x8xf32, #tpu.memory_space<vmem>>, %arg8: memref<1x8xf32, #tpu.memory_space<vmem>>, %arg9: memref<8x8xf32, #tpu.memory_space<vmem>>, %arg10: memref<1x16x8xf32, #tpu.memory_space<vmem>>) attributes {dimension_semantics = [#tpu.dimension_semantics<parallel>, #tpu.dimension_semantics<parallel>], iteration_bounds = array<i64: 2, 4>, scalar_prefetch = 0 : i64, scratch_operands = 0 : i64, tpu.core_type = #tpu.core_type<tc>, window_params = [{transform_indices = @transform_0, window_bounds = array<i64: 1, 16, 8>}, {transform_indices = @transform_1, window_bounds = array<i64: 1, 8, 8>}, {transform_indices = @transform_2, window_bounds = array<i64: 1, 8, 8>}, {pipeline_mode = #tpu.pipeline_mode<synchronous>, transform_indices = @transform_3, window_bounds = array<i64: 24, 4>}, {pipeline_mode = #tpu.pipeline_mode<synchronous>, transform_indices = @transform_4, window_bounds = array<i64: 1, 4>}, {pipeline_mode = #tpu.pipeline_mode<synchronous>, transform_indices = @transform_5, window_bounds = array<i64: 4, 8>}, {pipeline_mode = #tpu.pipeline_mode<synchronous>, transform_indices = @transform_6, window_bounds = array<i64: 1, 8>}, {pipeline_mode = #tpu.pipeline_mode<synchronous>, transform_indices = @transform_7, window_bounds = array<i64: 8, 8>}, {transform_indices = @transform_8, window_bounds = array<i64: 1, 16, 8>}]} {
    %c0 = arith.constant 0 : index
    %c0_0 = arith.constant 0 : index
    %c0_1 = arith.constant 0 : index
    %0 = vector.load %arg2[%c0, %c0_0, %c0_1] : memref<1x16x8xf32, #tpu.memory_space<vmem>>, vector<1x16x8xf32>
    %1 = vector.shape_cast %0 : vector<1x16x8xf32> to vector<16x8xf32>
    %cst = arith.constant 0.000000e+00 : f32
    %2 = vector.broadcast %cst : f32 to vector<16x8xf32>
    %3 = arith.cmpf ogt, %1, %2 : vector<16x8xf32>
    %4 = math.exp %1 : vector<16x8xf32>
    %cst_2 = arith.constant 1.000000e+00 : f32
    %5 = vector.broadcast %cst_2 : f32 to vector<16x8xf32>
    %6 = arith.subf %4, %5 : vector<16x8xf32>
    %cst_3 = arith.constant 1.000000e+00 : f32
    %7 = vector.broadcast %cst_3 : f32 to vector<16x8xf32>
    %8 = arith.mulf %7, %6 : vector<16x8xf32>
    %9 = arith.select %3, %1, %8 : vector<16x8xi1>, vector<16x8xf32>
    %c0_4 = arith.constant 0 : index
    %c7 = arith.constant 7 : index
    %c0_5 = arith.constant 0 : index
    %10 = vector.load %arg3[%c0_4, %c7, %c0_5] : memref<1x8x8xf32, #tpu.memory_space<vmem>>, vector<1x1x8xf32>
    %11 = vector.shape_cast %10 : vector<1x1x8xf32> to vector<1x8xf32>
    %cst_6 = arith.constant 0.000000e+00 : f32
    %12 = vector.broadcast %cst_6 : f32 to vector<1x8xf32>
    %13 = arith.cmpf ogt, %11, %12 : vector<1x8xf32>
    %14 = math.exp %11 : vector<1x8xf32>
    %cst_7 = arith.constant 1.000000e+00 : f32
    %15 = vector.broadcast %cst_7 : f32 to vector<1x8xf32>
    %16 = arith.subf %14, %15 : vector<1x8xf32>
    %cst_8 = arith.constant 1.000000e+00 : f32
    %17 = vector.broadcast %cst_8 : f32 to vector<1x8xf32>
    %18 = arith.mulf %17, %16 : vector<1x8xf32>
    %19 = arith.select %13, %11, %18 : vector<1x8xi1>, vector<1x8xf32>
    %20 = vector.extract_strided_slice %1 {offsets = [1, 0], sizes = [1, 8], strides = [1, 1]} : vector<16x8xf32> to vector<1x8xf32>
    %cst_9 = arith.constant 0.000000e+00 : f32
    %21 = vector.broadcast %cst_9 : f32 to vector<1x8xf32>
    %22 = arith.cmpf ogt, %20, %21 : vector<1x8xf32>
    %23 = math.exp %20 : vector<1x8xf32>
    %cst_10 = arith.constant 1.000000e+00 : f32
    %24 = vector.broadcast %cst_10 : f32 to vector<1x8xf32>
    %25 = arith.subf %23, %24 : vector<1x8xf32>
    %cst_11 = arith.constant 1.000000e+00 : f32
    %26 = vector.broadcast %cst_11 : f32 to vector<1x8xf32>
    %27 = arith.mulf %26, %25 : vector<1x8xf32>
    %28 = arith.select %22, %20, %27 : vector<1x8xi1>, vector<1x8xf32>
    %c0_i32 = arith.constant 0 : i32
    %29 = arith.cmpi eq, %arg1, %c0_i32 : i32
    %30 = arith.select %29, %28, %19 : vector<1x8xf32>
    %c0_12 = arith.constant 0 : index
    %c0_13 = arith.constant 0 : index
    %c0_14 = arith.constant 0 : index
    %31 = vector.load %arg4[%c0_12, %c0_13, %c0_14] : memref<1x8x8xf32, #tpu.memory_space<vmem>>, vector<1x1x8xf32>
    %32 = vector.shape_cast %31 : vector<1x1x8xf32> to vector<1x8xf32>
    %cst_15 = arith.constant 0.000000e+00 : f32
    %33 = vector.broadcast %cst_15 : f32 to vector<1x8xf32>
    %34 = arith.cmpf ogt, %32, %33 : vector<1x8xf32>
    %35 = math.exp %32 : vector<1x8xf32>
    %cst_16 = arith.constant 1.000000e+00 : f32
    %36 = vector.broadcast %cst_16 : f32 to vector<1x8xf32>
    %37 = arith.subf %35, %36 : vector<1x8xf32>
    %cst_17 = arith.constant 1.000000e+00 : f32
    %38 = vector.broadcast %cst_17 : f32 to vector<1x8xf32>
    %39 = arith.mulf %38, %37 : vector<1x8xf32>
    %40 = arith.select %34, %32, %39 : vector<1x8xi1>, vector<1x8xf32>
    %41 = vector.extract_strided_slice %1 {offsets = [14, 0], sizes = [1, 8], strides = [1, 1]} : vector<16x8xf32> to vector<1x8xf32>
    %cst_18 = arith.constant 0.000000e+00 : f32
    %42 = vector.broadcast %cst_18 : f32 to vector<1x8xf32>
    %43 = arith.cmpf ogt, %41, %42 : vector<1x8xf32>
    %44 = math.exp %41 : vector<1x8xf32>
    %cst_19 = arith.constant 1.000000e+00 : f32
    %45 = vector.broadcast %cst_19 : f32 to vector<1x8xf32>
    %46 = arith.subf %44, %45 : vector<1x8xf32>
    %cst_20 = arith.constant 1.000000e+00 : f32
    %47 = vector.broadcast %cst_20 : f32 to vector<1x8xf32>
    %48 = arith.mulf %47, %46 : vector<1x8xf32>
    %49 = arith.select %43, %41, %48 : vector<1x8xi1>, vector<1x8xf32>
    %c3_i32 = arith.constant 3 : i32
    %50 = arith.cmpi eq, %arg1, %c3_i32 : i32
    %51 = arith.select %50, %49, %40 : vector<1x8xf32>
    %52 = vector.extract_strided_slice %9 {offsets = [0, 0], sizes = [15, 8], strides = [1, 1]} : vector<16x8xf32> to vector<15x8xf32>
    %53 = tpu.concatenate %30, %52 in 0 : vector<1x8xf32>, vector<15x8xf32> -> vector<16x8xf32>
    %54 = vector.extract_strided_slice %9 {offsets = [1, 0], sizes = [15, 8], strides = [1, 1]} : vector<16x8xf32> to vector<15x8xf32>
    %55 = tpu.concatenate %54, %51 in 0 : vector<15x8xf32>, vector<1x8xf32> -> vector<16x8xf32>
    %56 = tpu.concatenate %53, %9, %55 in 1 : vector<16x8xf32>, vector<16x8xf32>, vector<16x8xf32> -> vector<16x24xf32>
    %c0_21 = arith.constant 0 : index
    %c0_22 = arith.constant 0 : index
    %57 = vector.load %arg5[%c0_21, %c0_22] : memref<24x4xf32, #tpu.memory_space<vmem>>, vector<24x4xf32>
    %cst_23 = arith.constant dense<0.000000e+00> : vector<16x4xf32>
    %58 = tpu.matmul %56, %57, %cst_23 {dimension_numbers = #tpu.dot_dimension_numbers<[1], [0], [0], [1], [0, 0, 1, 1], [], []>} : vector<16x24xf32>, vector<24x4xf32>, vector<16x4xf32> -> vector<16x4xf32>
    %c0_24 = arith.constant 0 : index
    %c0_25 = arith.constant 0 : index
    %59 = vector.load %arg6[%c0_24, %c0_25] : memref<1x4xf32, #tpu.memory_space<vmem>>, vector<1x4xf32>
    %60 = vector.broadcast %59 : vector<1x4xf32> to vector<16x4xf32>
    %61 = arith.addf %58, %60 : vector<16x4xf32>
    %cst_26 = arith.constant 0.000000e+00 : f32
    %62 = vector.broadcast %cst_26 : f32 to vector<16x4xf32>
    %63 = arith.cmpf ogt, %61, %62 : vector<16x4xf32>
    %64 = math.exp %61 : vector<16x4xf32>
    %cst_27 = arith.constant 1.000000e+00 : f32
    %65 = vector.broadcast %cst_27 : f32 to vector<16x4xf32>
    %66 = arith.subf %64, %65 : vector<16x4xf32>
    %cst_28 = arith.constant 1.000000e+00 : f32
    %67 = vector.broadcast %cst_28 : f32 to vector<16x4xf32>
    %68 = arith.mulf %67, %66 : vector<16x4xf32>
    %69 = arith.select %63, %61, %68 : vector<16x4xi1>, vector<16x4xf32>
    %c0_29 = arith.constant 0 : index
    %c0_30 = arith.constant 0 : index
    %70 = vector.load %arg7[%c0_29, %c0_30] : memref<4x8xf32, #tpu.memory_space<vmem>>, vector<4x8xf32>
    %cst_31 = arith.constant dense<0.000000e+00> : vector<16x8xf32>
    %71 = tpu.matmul %69, %70, %cst_31 {dimension_numbers = #tpu.dot_dimension_numbers<[1], [0], [0], [1], [0, 0, 1, 1], [], []>} : vector<16x4xf32>, vector<4x8xf32>, vector<16x8xf32> -> vector<16x8xf32>
    %c0_32 = arith.constant 0 : index
    %c0_33 = arith.constant 0 : index
    %72 = vector.load %arg9[%c0_32, %c0_33] : memref<8x8xf32, #tpu.memory_space<vmem>>, vector<8x8xf32>
    %cst_34 = arith.constant dense<0.000000e+00> : vector<16x8xf32>
    %73 = tpu.matmul %1, %72, %cst_34 {dimension_numbers = #tpu.dot_dimension_numbers<[1], [0], [0], [1], [0, 0, 1, 1], [], []>} : vector<16x8xf32>, vector<8x8xf32>, vector<16x8xf32> -> vector<16x8xf32>
    %74 = arith.addf %71, %73 : vector<16x8xf32>
    %c0_35 = arith.constant 0 : index
    %c0_36 = arith.constant 0 : index
    %75 = vector.load %arg8[%c0_35, %c0_36] : memref<1x8xf32, #tpu.memory_space<vmem>>, vector<1x8xf32>
    %76 = vector.broadcast %75 : vector<1x8xf32> to vector<16x8xf32>
    %77 = arith.addf %74, %76 : vector<16x8xf32>
    %c0_37 = arith.constant 0 : index
    %c0_38 = arith.constant 0 : index
    %c0_39 = arith.constant 0 : index
    %78 = vector.load %arg10[%c0_37, %c0_38, %c0_39] : memref<1x16x8xf32, #tpu.memory_space<vmem>>, vector<1x16x8xf32>
    %79 = vector.shape_cast %78 : vector<1x16x8xf32> to vector<16x8xf32>
    %80 = vector.shape_cast %77 : vector<16x8xf32> to vector<1x16x8xf32>
    tpu.vector_store %arg10[%c0_37, %c0_38, %c0_39], %80 {strides = array<i32>} : memref<1x16x8xf32, #tpu.memory_space<vmem>>, vector<1x16x8xf32>,
    return
  }
  func.func @transform_0(%arg0: i32, %arg1: i32) -> (i32, i32, i32) {
    %c0_i32 = arith.constant 0 : i32
    %c0_i32_0 = arith.constant 0 : i32
    return %arg0, %arg1, %c0_i32 : i32, i32, i32
  }
  func.func @transform_1(%arg0: i32, %arg1: i32) -> (i32, i32, i32) {
    %c2_i32 = arith.constant 2 : i32
    %0 = arith.muli %arg1, %c2_i32 : i32
    %c1_i32 = arith.constant 1 : i32
    %1 = arith.subi %0, %c1_i32 : i32
    %c0_i32 = arith.constant 0 : i32
    %2 = arith.maxsi %1, %c0_i32 : i32
    %c0_i32_0 = arith.constant 0 : i32
    %c0_i32_1 = arith.constant 0 : i32
    return %arg0, %2, %c0_i32_0 : i32, i32, i32
  }
  func.func @transform_2(%arg0: i32, %arg1: i32) -> (i32, i32, i32) {
    %c1_i32 = arith.constant 1 : i32
    %0 = arith.addi %arg1, %c1_i32 : i32
    %c2_i32 = arith.constant 2 : i32
    %1 = arith.muli %0, %c2_i32 : i32
    %c7_i32 = arith.constant 7 : i32
    %2 = arith.minsi %1, %c7_i32 : i32
    %c0_i32 = arith.constant 0 : i32
    %c0_i32_0 = arith.constant 0 : i32
    return %arg0, %2, %c0_i32 : i32, i32, i32
  }
  func.func @transform_3(%arg0: i32, %arg1: i32) -> (i32, i32) {
    %c0_i32 = arith.constant 0 : i32
    %c0_i32_0 = arith.constant 0 : i32
    %c0_i32_1 = arith.constant 0 : i32
    return %c0_i32, %c0_i32_0 : i32, i32
  }
  func.func @transform_4(%arg0: i32, %arg1: i32) -> (i32, i32) {
    %c0_i32 = arith.constant 0 : i32
    %c0_i32_0 = arith.constant 0 : i32
    %c0_i32_1 = arith.constant 0 : i32
    return %c0_i32, %c0_i32_0 : i32, i32
  }
  func.func @transform_5(%arg0: i32, %arg1: i32) -> (i32, i32) {
    %c0_i32 = arith.constant 0 : i32
    %c0_i32_0 = arith.constant 0 : i32
    %c0_i32_1 = arith.constant 0 : i32
    return %c0_i32, %c0_i32_0 : i32, i32
  }
  func.func @transform_6(%arg0: i32, %arg1: i32) -> (i32, i32) {
    %c0_i32 = arith.constant 0 : i32
    %c0_i32_0 = arith.constant 0 : i32
    %c0_i32_1 = arith.constant 0 : i32
    return %c0_i32, %c0_i32_0 : i32, i32
  }
  func.func @transform_7(%arg0: i32, %arg1: i32) -> (i32, i32) {
    %c0_i32 = arith.constant 0 : i32
    %c0_i32_0 = arith.constant 0 : i32
    %c0_i32_1 = arith.constant 0 : i32
    return %c0_i32, %c0_i32_0 : i32, i32
  }
  func.func @transform_8(%arg0: i32, %arg1: i32) -> (i32, i32, i32) {
    %c0_i32 = arith.constant 0 : i32
    %c0_i32_0 = arith.constant 0 : i32
    return %arg0, %arg1, %c0_i32 : i32, i32, i32
  }
}

</mosaic_0001>

<llo_original>
// kernel: tpu_custom_call.1
$region0: #{tpu_custom_call.1}
  #allocation0 [shape = 'u32[]', space=smem, size = 0x4, offset = 0x4, fixed_abs, tag = 'smem constant byte address 0x4 - core index']
  #allocation1 [shape = 'u32[72,128]{1,0:T(1,128)}', space=vmem, size = 0x9000, scoped, tag = 'internal scratch']
  %s0 = inlined_call_operand.vmem [shape: f32[2,64,8], index: 0, kind: input, shape index: {}]
  %s1 = inlined_call_operand.vmem [shape: f32[2,64,8], index: 1, kind: input, shape index: {}]
  %s2 = inlined_call_operand.vmem [shape: f32[2,64,8], index: 2, kind: input, shape index: {}]
  %s3 = inlined_call_operand.vmem [shape: f32[24,4], index: 3, kind: input, shape index: {}]
  %s4 = inlined_call_operand.vmem [shape: f32[1,4], index: 4, kind: input, shape index: {}]
  %s5 = inlined_call_operand.vmem [shape: f32[4,8], index: 5, kind: input, shape index: {}]
  %s6 = inlined_call_operand.vmem [shape: f32[1,8], index: 6, kind: input, shape index: {}]
  %s7 = inlined_call_operand.vmem [shape: f32[8,8], index: 7, kind: input, shape index: {}]
  %s8 = inlined_call_operand.vmem [shape: f32[2,64,8], index: 8, kind: output, shape index: {}]
  %s9 = sld [smem:[#allocation0]]
  $region65: #{tpu_custom_call.1} parent=0
    _
  %s11 = ssub.s32 1, %s9
  %s12 = scalar_select 0, %s11, %s9
  loop: start=0, step=1, limit=10
  $region2: #{tpu_custom_call.1} parent=0 // loop_pre_header
    _
  $region3: #{tpu_custom_call.1} parent=0 // loop_header
    %s14 = sphi 0, %s18
    %p15 = scmp.ge.s32.totalorder %s14, 10
    %s21 = sphi 0, %s33
    %s22 = sphi 0, %s29
    %s23 = sphi 0, %s21
    %s24 = sphi 0, %s22
    %s25 = sphi 0, %s23
    %s26 = sphi 0, %s24
    %s38 = sphi 0, %s40
    %s41 = sphi 0, %s38
    %s42 = sphi 0, %s41
    %s58 = sphi 0, %s42
    %s74 = sphi 0, %s76
    %s77 = sphi 0, %s74
    %s78 = sphi 0, %s77
    %s94 = sphi 0, %s78
    %s110 = sphi 0, %s112
    %s113 = sphi 0, %s110
    %s114 = sphi 0, %s113
    %s130 = sphi 0, %s114
    %s134 = sphi 0, %s134
    %s136 = sphi 0, %s134
    %s137 = sphi 0, %s136
    %s151 = sphi 0, %s137
    %s155 = sphi 0, %s155
    %s157 = sphi 0, %s155
    %s158 = sphi 0, %s157
    %s172 = sphi 0, %s158
    %s176 = sphi 0, %s176
    %s178 = sphi 0, %s176
    %s179 = sphi 0, %s178
    %s193 = sphi 0, %s179
    %s197 = sphi 0, %s197
    %s199 = sphi 0, %s197
    %s200 = sphi 0, %s199
    %s214 = sphi 0, %s200
    %s218 = sphi 0, %s218
    %s220 = sphi 0, %s218
    %s221 = sphi 0, %s220
    %s235 = sphi 0, %s221
    %s243 = sphi 0, %s245
    %s246 = sphi 0, %s243
    %s247 = sphi 0, %s246
    %s263 = sphi 0, %s247
  $region4: #{tpu_custom_call.1} parent=0 // loop_header_branch
    %17 = sbr.rel (%p15) target = $region8
  $region5: #{tpu_custom_call.1} parent=0 // loop_body
    %s19 = ssub.s32 %s14, 1
    %s20 = ssub.s32 %s14, 2
    %s27 = sadd.s32 1, %s22
    %p28 = scmp.ge.s32.totalorder %s27, 4
    %s29 = scalar_select %p28, 0, %s27
    %s30 = sadd.s32 1, %s21
    %s31 = scalar_select %p28, %s30, %s21
    %p32 = scmp.ge.s32.totalorder %s31, 2
    %s33 = scalar_select %p32, 0, %s31
    %s34 = ssub.s32 %s21, %s33
    %s35 = ssub.s32 %s22, %s29
    %s36 = sor.u32 %s34, %s35
    %p37 = scmp.eq.s32.totalorder %s36, 0
    %s39 = sadd.s32 %s38, 1
    %s40 = scalar_select %p37, %s38, %s39
    %p43 = pneg %p37
    %p44 = scmp.eq.s32.totalorder %s14, 7
    %p45 = por %p43, %p44
    %p46 = scmp.ne.s32.totalorder %s38, %s41
    %p47 = scmp.eq.s32.totalorder %s14, 0
    %p48 = por %p46, %p47
    %p49 = scmp.ne.s32.totalorder %s38, %s41
    %p50 = scmp.eq.s32.totalorder %s19, 7
    %p51 = por %p49, %p50
    %p52 = scmp.ne.s32.totalorder %s41, %s42
    %p53 = scmp.eq.s32.totalorder %s19, 0
    %p54 = por %p52, %p53
    %p55 = scmp.ne.s32.totalorder %s41, %s42
    %p56 = scmp.eq.s32.totalorder %s20, 7
    %p57 = por %p55, %p56
    %p59 = scmp.ne.s32.totalorder %s42, %s58
    %p60 = scmp.eq.s32.totalorder %s20, 0
    %p61 = por %p59, %p60
    %s62 = smul.u32 %s22, 2
    %s63 = ssub.s32 %s62, 1
    %p64 = scmp.gt.s32.totalorder %s63, 0
    %s65 = scalar_select %p64, %s63, 0
    %s66 = smul.u32 %s29, 2
    %s67 = ssub.s32 %s66, 1
    %p68 = scmp.gt.s32.totalorder %s67, 0
    %s69 = scalar_select %p68, %s67, 0
    %s70 = ssub.s32 %s21, %s33
    %s71 = ssub.s32 %s65, %s69
    %s72 = sor.u32 %s70, %s71
    %p73 = scmp.eq.s32.totalorder %s72, 0
    %s75 = sadd.s32 %s74, 1
    %s76 = scalar_select %p73, %s74, %s75
    %p79 = pneg %p73
    %p80 = scmp.eq.s32.totalorder %s14, 7
    %p81 = por %p79, %p80
    %p82 = scmp.ne.s32.totalorder %s74, %s77
    %p83 = scmp.eq.s32.totalorder %s14, 0
    %p84 = por %p82, %p83
    %p85 = scmp.ne.s32.totalorder %s74, %s77
    %p86 = scmp.eq.s32.totalorder %s19, 7
    %p87 = por %p85, %p86
    %p88 = scmp.ne.s32.totalorder %s77, %s78
    %p89 = scmp.eq.s32.totalorder %s19, 0
    %p90 = por %p88, %p89
    %p91 = scmp.ne.s32.totalorder %s77, %s78
    %p92 = scmp.eq.s32.totalorder %s20, 7
    %p93 = por %p91, %p92
    %p95 = scmp.ne.s32.totalorder %s78, %s94
    %p96 = scmp.eq.s32.totalorder %s20, 0
    %p97 = por %p95, %p96
    %s98 = sadd.s32 %s22, 1
    %s99 = smul.u32 %s98, 2
    %p100 = scmp.lt.s32.totalorder %s99, 7
    %s101 = scalar_select %p100, %s99, 7
    %s102 = sadd.s32 %s29, 1
    %s103 = smul.u32 %s102, 2
    %p104 = scmp.lt.s32.totalorder %s103, 7
    %s105 = scalar_select %p104, %s103, 7
    %s106 = ssub.s32 %s21, %s33
    %s107 = ssub.s32 %s101, %s105
    %s108 = sor.u32 %s106, %s107
    %p109 = scmp.eq.s32.totalorder %s108, 0
    %s111 = sadd.s32 %s110, 1
    %s112 = scalar_select %p109, %s110, %s111
    %p115 = pneg %p109
    %p116 = scmp.eq.s32.totalorder %s14, 7
    %p117 = por %p115, %p116
    %p118 = scmp.ne.s32.totalorder %s110, %s113
    %p119 = scmp.eq.s32.totalorder %s14, 0
    %p120 = por %p118, %p119
    %p121 = scmp.ne.s32.totalorder %s110, %s113
    %p122 = scmp.eq.s32.totalorder %s19, 7
    %p123 = por %p121, %p122
    %p124 = scmp.ne.s32.totalorder %s113, %s114
    %p125 = scmp.eq.s32.totalorder %s19, 0
    %p126 = por %p124, %p125
    %p127 = scmp.ne.s32.totalorder %s113, %s114
    %p128 = scmp.eq.s32.totalorder %s20, 7
    %p129 = por %p127, %p128
    %p131 = scmp.ne.s32.totalorder %s114, %s130
    %p132 = scmp.eq.s32.totalorder %s20, 0
    %p133 = por %p131, %p132
    %s135 = sadd.s32 %s134, 1
    %p138 = scmp.eq.s32.totalorder %s14, 7
    %p139 = scmp.ne.s32.totalorder %s134, %s136
    %p140 = scmp.eq.s32.totalorder %s14, 0
    %p141 = por %p139, %p140
    %p142 = scmp.ne.s32.totalorder %s134, %s136
    %p143 = scmp.eq.s32.totalorder %s19, 7
    %p144 = por %p142, %p143
    %p145 = scmp.ne.s32.totalorder %s136, %s137
    %p146 = scmp.eq.s32.totalorder %s19, 0
    %p147 = por %p145, %p146
    %p148 = scmp.ne.s32.totalorder %s136, %s137
    %p149 = scmp.eq.s32.totalorder %s20, 7
    %p150 = por %p148, %p149
    %p152 = scmp.ne.s32.totalorder %s137, %s151
    %p153 = scmp.eq.s32.totalorder %s20, 0
    %p154 = por %p152, %p153
    %s156 = sadd.s32 %s155, 1
    %p159 = scmp.eq.s32.totalorder %s14, 7
    %p160 = scmp.ne.s32.totalorder %s155, %s157
    %p161 = scmp.eq.s32.totalorder %s14, 0
    %p162 = por %p160, %p161
    %p163 = scmp.ne.s32.totalorder %s155, %s157
    %p164 = scmp.eq.s32.totalorder %s19, 7
    %p165 = por %p163, %p164
    %p166 = scmp.ne.s32.totalorder %s157, %s158
    %p167 = scmp.eq.s32.totalorder %s19, 0
    %p168 = por %p166, %p167
    %p169 = scmp.ne.s32.totalorder %s157, %s158
    %p170 = scmp.eq.s32.totalorder %s20, 7
    %p171 = por %p169, %p170
    %p173 = scmp.ne.s32.totalorder %s158, %s172
    %p174 = scmp.eq.s32.totalorder %s20, 0
    %p175 = por %p173, %p174
    %s177 = sadd.s32 %s176, 1
    %p180 = scmp.eq.s32.totalorder %s14, 7
    %p181 = scmp.ne.s32.totalorder %s176, %s178
    %p182 = scmp.eq.s32.totalorder %s14, 0
    %p183 = por %p181, %p182
    %p184 = scmp.ne.s32.totalorder %s176, %s178
    %p185 = scmp.eq.s32.totalorder %s19, 7
    %p186 = por %p184, %p185
    %p187 = scmp.ne.s32.totalorder %s178, %s179
    %p188 = scmp.eq.s32.totalorder %s19, 0
    %p189 = por %p187, %p188
    %p190 = scmp.ne.s32.totalorder %s178, %s179
    %p191 = scmp.eq.s32.totalorder %s20, 7
    %p192 = por %p190, %p191
    %p194 = scmp.ne.s32.totalorder %s179, %s193
    %p195 = scmp.eq.s32.totalorder %s20, 0
    %p196 = por %p194, %p195
    %s198 = sadd.s32 %s197, 1
    %p201 = scmp.eq.s32.totalorder %s14, 7
    %p202 = scmp.ne.s32.totalorder %s197, %s199
    %p203 = scmp.eq.s32.totalorder %s14, 0
    %p204 = por %p202, %p203
    %p205 = scmp.ne.s32.totalorder %s197, %s199
    %p206 = scmp.eq.s32.totalorder %s19, 7
    %p207 = por %p205, %p206
    %p208 = scmp.ne.s32.totalorder %s199, %s200
    %p209 = scmp.eq.s32.totalorder %s19, 0
    %p210 = por %p208, %p209
    %p211 = scmp.ne.s32.totalorder %s199, %s200
    %p212 = scmp.eq.s32.totalorder %s20, 7
    %p213 = por %p211, %p212
    %p215 = scmp.ne.s32.totalorder %s200, %s214
    %p216 = scmp.eq.s32.totalorder %s20, 0
    %p217 = por %p215, %p216
    %s219 = sadd.s32 %s218, 1
    %p222 = scmp.eq.s32.totalorder %s14, 7
    %p223 = scmp.ne.s32.totalorder %s218, %s220
    %p224 = scmp.eq.s32.totalorder %s14, 0
    %p225 = por %p223, %p224
    %p226 = scmp.ne.s32.totalorder %s218, %s220
    %p227 = scmp.eq.s32.totalorder %s19, 7
    %p228 = por %p226, %p227
    %p229 = scmp.ne.s32.totalorder %s220, %s221
    %p230 = scmp.eq.s32.totalorder %s19, 0
    %p231 = por %p229, %p230
    %p232 = scmp.ne.s32.totalorder %s220, %s221
    %p233 = scmp.eq.s32.totalorder %s20, 7
    %p234 = por %p232, %p233
    %p236 = scmp.ne.s32.totalorder %s221, %s235
    %p237 = scmp.eq.s32.totalorder %s20, 0
    %p238 = por %p236, %p237
    %s239 = ssub.s32 %s21, %s33
    %s240 = ssub.s32 %s22, %s29
    %s241 = sor.u32 %s239, %s240
    %p242 = scmp.eq.s32.totalorder %s241, 0
    %s244 = sadd.s32 %s243, 1
    %s245 = scalar_select %p242, %s243, %s244
    %p248 = pneg %p242
    %p249 = scmp.eq.s32.totalorder %s14, 7
    %p250 = por %p248, %p249
    %p251 = scmp.ne.s32.totalorder %s243, %s246
    %p252 = scmp.eq.s32.totalorder %s14, 0
    %p253 = por %p251, %p252
    %p254 = scmp.ne.s32.totalorder %s243, %s246
    %p255 = scmp.eq.s32.totalorder %s19, 7
    %p256 = por %p254, %p255
    %p257 = scmp.ne.s32.totalorder %s246, %s247
    %p258 = scmp.eq.s32.totalorder %s19, 0
    %p259 = por %p257, %p258
    %p260 = scmp.ne.s32.totalorder %s246, %s247
    %p261 = scmp.eq.s32.totalorder %s20, 7
    %p262 = por %p260, %p261
    %p264 = scmp.ne.s32.totalorder %s247, %s263
    %p265 = scmp.eq.s32.totalorder %s20, 0
    %p266 = por %p264, %p265
    %p267 = scmp.le.s32.totalorder 1, %s14
    %p268 = scmp.lt.s32.totalorder %s14, 9
    %p269 = pnand %p267, %p268
    %p270 = pneg %p269
    // Predicated region
    $region9: #{tpu_custom_call.1} parent=5 // pred_check
      _
    $region10: #{tpu_custom_call.1} parent=5 // pred_check_branch
      %272 = sbr.rel (%p269) target = $region12
    $region11: #{tpu_custom_call.1} parent=5 // pred_region
      %s273 = ssub.s32 %s14, 1
      // Predicated region
      $region13: #{tpu_custom_call.1} parent=11 // pred_check
        %p274 = pneg %p147
      $region14: #{tpu_custom_call.1} parent=11 // pred_check_branch
        %276 = sbr.rel (%p274) target = $region16
      $region15: #{tpu_custom_call.1} parent=11 // pred_region
        _
      $region16: #{tpu_custom_call.1} parent=11 // pred_fallthru
        _
      // Predicated region
      $region17: #{tpu_custom_call.1} parent=11 // pred_check
        %p277 = pneg %p168
      $region18: #{tpu_custom_call.1} parent=11 // pred_check_branch
        %279 = sbr.rel (%p277) target = $region20
      $region19: #{tpu_custom_call.1} parent=11 // pred_region
        _
      $region20: #{tpu_custom_call.1} parent=11 // pred_fallthru
        _
      // Predicated region
      $region21: #{tpu_custom_call.1} parent=11 // pred_check
        %p280 = pneg %p189
      $region22: #{tpu_custom_call.1} parent=11 // pred_check_branch
        %282 = sbr.rel (%p280) target = $region24
      $region23: #{tpu_custom_call.1} parent=11 // pred_region
        _
      $region24: #{tpu_custom_call.1} parent=11 // pred_fallthru
        _
      // Predicated region
      $region25: #{tpu_custom_call.1} parent=11 // pred_check
        %p283 = pneg %p210
      $region26: #{tpu_custom_call.1} parent=11 // pred_check_branch
        %285 = sbr.rel (%p283) target = $region28
      $region27: #{tpu_custom_call.1} parent=11 // pred_region
        _
      $region28: #{tpu_custom_call.1} parent=11 // pred_fallthru
        _
      // Predicated region
      $region29: #{tpu_custom_call.1} parent=11 // pred_check
        %p286 = pneg %p231
      $region30: #{tpu_custom_call.1} parent=11 // pred_check_branch
        %288 = sbr.rel (%p286) target = $region32
      $region31: #{tpu_custom_call.1} parent=11 // pred_region
        _
      $region32: #{tpu_custom_call.1} parent=11 // pred_fallthru
        _
    $region12: #{tpu_custom_call.1} parent=5 // pred_fallthru
      _
    %p289 = scmp.lt.s32.totalorder %s14, 8
    // Predicated region
    $region33: #{tpu_custom_call.1} parent=5 // pred_check
      %p290 = pneg %p289
    $region34: #{tpu_custom_call.1} parent=5 // pred_check_branch
      %292 = sbr.rel (%p290) target = $region36
    $region35: #{tpu_custom_call.1} parent=5 // pred_region
      // Predicated region
      $region37: #{tpu_custom_call.1} parent=35 // pred_check
        %p293 = pneg %p48
      $region38: #{tpu_custom_call.1} parent=35 // pred_check_branch
        %295 = sbr.rel (%p293) target = $region40
      $region39: #{tpu_custom_call.1} parent=35 // pred_region
        %s296 = smul.u32 2, %s22
        %p297 = scmp.lt.s32.totalorder %s21, 1
        %s298 = scalar_select %p297, %s21, 1
        %p299 = scmp.lt.s32.totalorder %s296, 7
        %s300 = scalar_select %p299, %s296, 7
        %s301 = smul.addr %s298, 8
        %s302 = sadd.s32 %s300, %s301
        %s303 = smul.addr %s302, 8
        %s304 = scalar_lea.vmem %s0, %s303
        %s305 = smul.u32 2, %s22
      $region40: #{tpu_custom_call.1} parent=35 // pred_fallthru
        _
      // Predicated region
      $region41: #{tpu_custom_call.1} parent=35 // pred_check
        %p306 = pneg %p84
      $region42: #{tpu_custom_call.1} parent=35 // pred_check_branch
        %308 = sbr.rel (%p306) target = $region44
      $region43: #{tpu_custom_call.1} parent=35 // pred_region
        %s309 = smul.u32 %s22, 2
        %s310 = ssub.s32 %s309, 1
        %p311 = scmp.gt.s32.totalorder %s310, 0
        %s312 = scalar_select %p311, %s310, 0
        %p313 = scmp.lt.s32.totalorder %s21, 1
        %s314 = scalar_select %p313, %s21, 1
        %p315 = scmp.lt.s32.totalorder %s312, 7
        %s316 = scalar_select %p315, %s312, 7
        %s317 = smul.addr %s314, 8
        %s318 = sadd.s32 %s316, %s317
        %s319 = smul.addr %s318, 8
        %s320 = scalar_lea.vmem %s1, %s319
        %s321 = smul.u32 %s22, 2
        %s322 = ssub.s32 %s321, 1
        %p323 = scmp.gt.s32.totalorder %s322, 0
        %s324 = scalar_select %p323, %s322, 0
      $region44: #{tpu_custom_call.1} parent=35 // pred_fallthru
        _
      // Predicated region
      $region45: #{tpu_custom_call.1} parent=35 // pred_check
        %p325 = pneg %p120
      $region46: #{tpu_custom_call.1} parent=35 // pred_check_branch
        %327 = sbr.rel (%p325) target = $region48
      $region47: #{tpu_custom_call.1} parent=35 // pred_region
        %s328 = sadd.s32 %s22, 1
        %s329 = smul.u32 %s328, 2
        %p330 = scmp.lt.s32.totalorder %s329, 7
        %s331 = scalar_select %p330, %s329, 7
        %p332 = scmp.lt.s32.totalorder %s21, 1
        %s333 = scalar_select %p332, %s21, 1
        %p334 = scmp.lt.s32.totalorder %s331, 7
        %s335 = scalar_select %p334, %s331, 7
        %s336 = smul.addr %s333, 8
        %s337 = sadd.s32 %s335, %s336
        %s338 = smul.addr %s337, 8
        %s339 = scalar_lea.vmem %s2, %s338
        %s340 = sadd.s32 %s22, 1
        %s341 = smul.u32 %s340, 2
        %p342 = scmp.lt.s32.totalorder %s341, 7
        %s343 = scalar_select %p342, %s341, 7
      $region48: #{tpu_custom_call.1} parent=35 // pred_fallthru
        _
    $region36: #{tpu_custom_call.1} parent=5 // pred_fallthru
      _
    %p344 = scmp.le.s32.totalorder 1, %s14
    %p345 = scmp.lt.s32.totalorder %s14, 9
    %p346 = pnand %p344, %p345
    %p347 = pneg %p346
    // Predicated region
    $region49: #{tpu_custom_call.1} parent=5 // pred_check
      _
    $region50: #{tpu_custom_call.1} parent=5 // pred_check_branch
      %349 = sbr.rel (%p346) target = $region52
    $region51: #{tpu_custom_call.1} parent=5 // pred_region
      %s350 = ssub.s32 %s14, 1
      %s351 = smul.u32 2, %s24
      %p352 = scmp.lt.s32.totalorder %s23, 1
      %s353 = scalar_select %p352, %s23, 1
      %p354 = scmp.lt.s32.totalorder %s351, 7
      %s355 = scalar_select %p354, %s351, 7
      %s356 = smul.addr %s353, 8
      %s357 = sadd.s32 %s355, %s356
      %s358 = smul.addr %s357, 8
      %s359 = scalar_lea.vmem %s0, %s358
      %p360 = pneg %p54
      %p361 = pneg %p51
      %s362 = smul.u32 %s24, 2
      %s363 = ssub.s32 %s362, 1
      %p364 = scmp.gt.s32.totalorder %s363, 0
      %s365 = scalar_select %p364, %s363, 0
      %p366 = scmp.lt.s32.totalorder %s23, 1
      %s367 = scalar_select %p366, %s23, 1
      %p368 = scmp.lt.s32.totalorder %s365, 7
      %s369 = scalar_select %p368, %s365, 7
      %s370 = smul.addr %s367, 8
      %s371 = sadd.s32 %s369, %s370
      %s372 = smul.addr %s371, 8
      %s373 = scalar_lea.vmem %s1, %s372
      %p374 = pneg %p90
      %p375 = pneg %p87
      %s376 = sadd.s32 %s24, 1
      %s377 = smul.u32 %s376, 2
      %p378 = scmp.lt.s32.totalorder %s377, 7
      %s379 = scalar_select %p378, %s377, 7
      %p380 = scmp.lt.s32.totalorder %s23, 1
      %s381 = scalar_select %p380, %s23, 1
      %p382 = scmp.lt.s32.totalorder %s379, 7
      %s383 = scalar_select %p382, %s379, 7
      %s384 = smul.addr %s381, 8
      %s385 = sadd.s32 %s383, %s384
      %s386 = smul.addr %s385, 8
      %s387 = scalar_lea.vmem %s2, %s386
      %p388 = pneg %p126
      %p389 = pneg %p123
      %p390 = pneg %p147
      %p391 = pneg %p144
      %p392 = pneg %p168
      %p393 = pneg %p165
      %p394 = pneg %p189
      %p395 = pneg %p186
      %p396 = pneg %p210
      %p397 = pneg %p207
      %p398 = pneg %p231
      %p399 = pneg %p228
      %p400 = pneg %p259
      %p401 = pneg %p256
      %s402 = smul.u32 2, %s24
      %p403 = scmp.lt.s32.totalorder %s23, 1
      %s404 = scalar_select %p403, %s23, 1
      %p405 = scmp.lt.s32.totalorder %s402, 7
      %s406 = scalar_select %p405, %s402, 7
      %s407 = smul.addr %s404, 8
      %s408 = sadd.s32 %s406, %s407
      %s409 = smul.addr %s408, 8
      %s410 = scalar_lea.vmem %s8, %s409
      %s411 = smul.u32 2, %s24
      %p412 = scmp.lt.s32.totalorder %s23, 1
      %s413 = scalar_select %p412, %s23, 1
      %p414 = scmp.lt.s32.totalorder %s411, 7
      %s415 = scalar_select %p414, %s411, 7
      %s416 = smul.addr %s413, 8
      %s417 = sadd.s32 %s415, %s416
      %s418 = smul.addr %s417, 8
      %s419 = scalar_lea.vmem %s0, %s418
      %s420 = smul.u32 2, %s24
      %s421 = smul.u32 %s24, 2
      %s422 = ssub.s32 %s421, 1
      %p423 = scmp.gt.s32.totalorder %s422, 0
      %s424 = scalar_select %p423, %s422, 0
      %p425 = scmp.lt.s32.totalorder %s23, 1
      %s426 = scalar_select %p425, %s23, 1
      %p427 = scmp.lt.s32.totalorder %s424, 7
      %s428 = scalar_select %p427, %s424, 7
      %s429 = smul.addr %s426, 8
      %s430 = sadd.s32 %s428, %s429
      %s431 = smul.addr %s430, 8
      %s432 = scalar_lea.vmem %s1, %s431
      %s433 = smul.u32 %s24, 2
      %s434 = ssub.s32 %s433, 1
      %p435 = scmp.gt.s32.totalorder %s434, 0
      %s436 = scalar_select %p435, %s434, 0
      %s437 = sadd.s32 %s24, 1
      %s438 = smul.u32 %s437, 2
      %p439 = scmp.lt.s32.totalorder %s438, 7
      %s440 = scalar_select %p439, %s438, 7
      %p441 = scmp.lt.s32.totalorder %s23, 1
      %s442 = scalar_select %p441, %s23, 1
      %p443 = scmp.lt.s32.totalorder %s440, 7
      %s444 = scalar_select %p443, %s440, 7
      %s445 = smul.addr %s442, 8
      %s446 = sadd.s32 %s444, %s445
      %s447 = smul.addr %s446, 8
      %s448 = scalar_lea.vmem %s2, %s447
      %s449 = sadd.s32 %s24, 1
      %s450 = smul.u32 %s449, 2
      %p451 = scmp.lt.s32.totalorder %s450, 7
      %s452 = scalar_select %p451, %s450, 7
      %s453 = smul.u32 2, %s24
      %p454 = scmp.lt.s32.totalorder %s23, 1
      %s455 = scalar_select %p454, %s23, 1
      %p456 = scmp.lt.s32.totalorder %s453, 7
      %s457 = scalar_select %p456, %s453, 7
      %s458 = smul.addr %s455, 8
      %s459 = sadd.s32 %s457, %s458
      %s460 = smul.addr %s459, 8
      %s461 = scalar_lea.vmem %s8, %s460
      %s462 = smul.u32 2, %s24
      %v463 = vld [vmem:[%s419] sm:$0xff]
      %v464 = vld [vmem:[%s419 + $0x8] sm:$0xff]
      %vm465 = vcmp.gt.f32.partialorder %v463, 0.0
      %vm466 = vcmp.gt.f32.partialorder %v464, 0.0
      %v467 = vmul.f32 %v463, 1.442695
      %v468 = vpow.pop %v467
      %v469 = vmul.f32 %v464, 1.442695
      %v470 = vpow.pop %v469
      %v471 = vsub.f32 %v468, 1.0
      %v472 = vsub.f32 %v470, 1.0
      %v473 = vsel %vm465, %v463, %v471
      %v474 = vsel %vm466, %v464, %v472
      %v475 = vld [vmem:[%s432 + $0x7] sm:$0x1]
      %vm476 = vcmp.gt.f32.partialorder %v475, 0.0
      %v477 = vmul.f32 %v475, 1.442695
      %v478 = vpow.pop %v477
      %v479 = vsub.f32 %v478, 1.0
      %v480 = vsel %vm476, %v475, %v479
      %p481 = scmp.eq.s32.totalorder %s24, 0
      %s482 = scalar_select %p481, 1, 0
      %v483 = vstv %s482
      %vm484 = vcmp.eq.s32.totalorder %v483, 1
      %v486 = vrot.slane %v480, 7
      %v488 = vsel %vm484, %v473, %v486
      %v489 = vld [vmem:[%s448] sm:$0x1]
      %vm490 = vcmp.gt.f32.partialorder %v489, 0.0
      %v491 = vmul.f32 %v489, 1.442695
      %v492 = vpow.pop %v491
      %v493 = vsub.f32 %v492, 1.0
      %v494 = vsel %vm490, %v489, %v493
      %p495 = scmp.eq.s32.totalorder %s24, 3
      %s496 = scalar_select %p495, 1, 0
      %v497 = vstv %s496
      %vm498 = vcmp.eq.s32.totalorder %v497, 1
      %v500 = vrot.slane %v494, 2
      %v502 = vsel %vm498, %v474, %v500
      %v504 = vrot.slane %v488, 1
      %vm508 = vcmask 1040384
      %v509 = vrot.slane %v473, 7
      %v510 = vrot.slane %v474, 7
      %v511 = vsel %vm508, %v509, %v510
      %v514 = vsel %vm508, %v504, %v509
      %vm515 = vcmask 1046528
      %v516 = vrot.slane %v473, 1
      %v517 = vrot.slane %v474, 1
      %v518 = vsel %vm515, %v516, %v517
      %v521 = vrot.slane %v502, 7
      %v523 = vsel %vm515, %v517, %v521
      %524 = vrot.lane.b32.xlu0 %v473, 8
      %v525 = vpop.permute.xlu0 %524
      %526 = vrot.lane.b32.xlu0 %v474, 8
      %v527 = vpop.permute.xlu0 %526
      %531 = vrot.lane.b32.xlu0 %v518, 16
      %v532 = vpop.permute.xlu0 %531
      %533 = vrot.lane.b32.xlu0 %v523, 16
      %v534 = vpop.permute.xlu0 %533
      %vm537 = vcmask 64512
      %v538 = vsel %vm537, %v514, %v525
      %v539 = vsel %vm537, %v511, %v527
      %vm540 = vcmask 130048
      %v541 = vsel %vm540, %v538, %v532
      %v542 = vsel %vm540, %v539, %v534
      %v543 = vld [vmem:[%s3] sm:$0xff]
      %v544 = vld [vmem:[%s3 + $0x8] sm:$0xff]
      %v545 = vld [vmem:[%s3 + $0x10] sm:$0xff]
      %v546 = vld [vmem:[%s4] sm:$0x1]
      %v548 = vperm.slane %v546, 0
      %vm550 = vcmask 195584
      %v552 = vsel %vm550, %v541, 0
      %v555 = vsel %vm550, %v542, 0
      %557 = vmatpush.msra.mxu0 0.0
      %558 = vmatpush.msra.mxu0 0.0
      %559 = vmatpush.msra.mxu0 0.0
      %560 = vmatpush.msra.mxu0 0.0
      %561 = vmatpush.msra.mxu0 0.0
      %562 = vmatpush.msra.mxu0 0.0
      %563 = vmatpush.msra.mxu0 0.0
      %564 = vmatpush.msra.mxu0 0.0
      %565 = vmatpush.msra.mxu0 0.0
      %566 = vmatpush.msra.mxu0 0.0
      %567 = vmatpush.msra.mxu0 0.0
      %568 = vmatpush.msra.mxu0 0.0
      %569 = vmatpush.msra.mxu0 0.0
      %570 = vmatpush.msra.mxu0 %v545
      %571 = vmatpush.msra.mxu0 %v544
      %572 = vmatpush.msra.mxu0 %v543
      %573 = vmatmul.f32.gmra.mxu0 %v552
      %v574 = vpop.f32.mrf.mxu0
      %v575 = vadd.f32 %v548, %v574
      %576 = vmatmul.f32.gmra.mxu0 %v555
      %v577 = vpop.f32.mrf.mxu0
      %v578 = vadd.f32 %v548, %v577
      %579 = vdwg.mxu0
      %vm580 = vcmp.gt.f32.partialorder %v575, 0.0
      %vm581 = vcmp.gt.f32.partialorder %v578, 0.0
      %v582 = vmul.f32 %v575, 1.442695
      %v583 = vpow.pop %v582
      %v584 = vmul.f32 %v578, 1.442695
      %v585 = vpow.pop %v584
      %v586 = vsub.f32 %v583, 1.0
      %v587 = vsub.f32 %v585, 1.0
      %v588 = vsel %vm580, %v575, %v586
      %v589 = vsel %vm581, %v578, %v587
      %v590 = vld [vmem:[%s5] sm:$0xf]
      %v591 = vld [vmem:[%s7] sm:$0xff]
      %v593 = vsel %vm537, %v463, 0
      %v596 = vsel %vm537, %v464, 0
      %598 = vmatpush.msra.mxu0 0.0
      %599 = vmatpush.msra.mxu0 0.0
      %600 = vmatpush.msra.mxu0 0.0
      %601 = vmatpush.msra.mxu0 0.0
      %602 = vmatpush.msra.mxu0 0.0
      %603 = vmatpush.msra.mxu0 0.0
      %604 = vmatpush.msra.mxu0 0.0
      %605 = vmatpush.msra.mxu0 0.0
      %606 = vmatpush.msra.mxu0 0.0
      %607 = vmatpush.msra.mxu0 0.0
      %608 = vmatpush.msra.mxu0 0.0
      %609 = vmatpush.msra.mxu0 0.0
      %610 = vmatpush.msra.mxu0 0.0
      %611 = vmatpush.msra.mxu0 0.0
      %612 = vmatpush.msra.mxu0 0.0
      %613 = vmatpush.msra.mxu0 %v591
      %614 = vmatmul.f32.gmra.mxu0 %v593
      %v615 = vpop.f32.mrf.mxu0
      %v616 = vadd.f32 0.0, %v615
      %617 = vmatmul.f32.gmra.mxu0 %v596
      %v618 = vpop.f32.mrf.mxu0
      %v619 = vadd.f32 0.0, %v618
      %620 = vdwg.mxu0
      %vm621 = vcmask 31744
      %v623 = vsel %vm621, %v588, 0
      %v626 = vsel %vm621, %v589, 0
      %vm628 = vcmask 1043456
      %v630 = vsel %vm628, %v590, 0
      %632 = vmatpush.msra.mxu0 0.0
      %633 = vmatpush.msra.mxu0 0.0
      %634 = vmatpush.msra.mxu0 0.0
      %635 = vmatpush.msra.mxu0 0.0
      %636 = vmatpush.msra.mxu0 0.0
      %637 = vmatpush.msra.mxu0 0.0
      %638 = vmatpush.msra.mxu0 0.0
      %639 = vmatpush.msra.mxu0 0.0
      %640 = vmatpush.msra.mxu0 0.0
      %641 = vmatpush.msra.mxu0 0.0
      %642 = vmatpush.msra.mxu0 0.0
      %643 = vmatpush.msra.mxu0 0.0
      %644 = vmatpush.msra.mxu0 0.0
      %645 = vmatpush.msra.mxu0 0.0
      %646 = vmatpush.msra.mxu0 0.0
      %647 = vmatpush.msra.mxu0 %v630
      %648 = vmatmul.f32.gmra.mxu0 %v623
      %v649 = vpop.f32.mrf.mxu0
      %v650 = vadd.f32 %v616, %v649
      %651 = vmatmul.f32.gmra.mxu0 %v626
      %v652 = vpop.f32.mrf.mxu0
      %v653 = vadd.f32 %v619, %v652
      %654 = vdwg.mxu0
      %v655 = vld [vmem:[%s6] sm:$0x1]
      %v657 = vperm.slane %v655, 0
      %v659 = vadd.f32 %v650, %v657
      %v660 = vadd.f32 %v653, %v657
      %661 = vst.msk [vmem:[%s461] sm:$0xff] %vm537, %v659
      %662 = vst.msk [vmem:[%s461 + $0x8] sm:$0xff] %vm537, %v660
      %s663 = smul.u32 2, %s24
      %p664 = scmp.lt.s32.totalorder %s23, 1
      %s665 = scalar_select %p664, %s23, 1
      %p666 = scmp.lt.s32.totalorder %s663, 7
      %s667 = scalar_select %p666, %s663, 7
      %s668 = smul.addr %s665, 8
      %s669 = sadd.s32 %s667, %s668
      %s670 = smul.addr %s669, 8
      %s671 = scalar_lea.vmem %s8, %s670
      // Predicated region
      $region53: #{tpu_custom_call.1} parent=51 // pred_check
        %p672 = pneg %p256
      $region54: #{tpu_custom_call.1} parent=51 // pred_check_branch
        %674 = sbr.rel (%p672) target = $region56
      $region55: #{tpu_custom_call.1} parent=51 // pred_region
        %s675 = smul.u32 2, %s24
      $region56: #{tpu_custom_call.1} parent=51 // pred_fallthru
        _
    $region52: #{tpu_custom_call.1} parent=5 // pred_fallthru
      _
    %p676 = scmp.le.s32.totalorder 2, %s14
    // Predicated region
    $region57: #{tpu_custom_call.1} parent=5 // pred_check
      %p677 = pneg %p676
    $region58: #{tpu_custom_call.1} parent=5 // pred_check_branch
      %679 = sbr.rel (%p677) target = $region60
    $region59: #{tpu_custom_call.1} parent=5 // pred_region
      %s680 = ssub.s32 %s14, 2
      // Predicated region
      $region61: #{tpu_custom_call.1} parent=59 // pred_check
        %p681 = pneg %p262
      $region62: #{tpu_custom_call.1} parent=59 // pred_check_branch
        %683 = sbr.rel (%p681) target = $region64
      $region63: #{tpu_custom_call.1} parent=59 // pred_region
        %s684 = smul.u32 2, %s26
        %p685 = scmp.lt.s32.totalorder %s25, 1
        %s686 = scalar_select %p685, %s25, 1
        %p687 = scmp.lt.s32.totalorder %s684, 7
        %s688 = scalar_select %p687, %s684, 7
        %s689 = smul.addr %s686, 8
        %s690 = sadd.s32 %s688, %s689
        %s691 = smul.addr %s690, 8
        %s692 = scalar_lea.vmem %s8, %s691
      $region64: #{tpu_custom_call.1} parent=59 // pred_fallthru
        _
    $region60: #{tpu_custom_call.1} parent=5 // pred_fallthru
      _
  $region6: #{tpu_custom_call.1} parent=0 // loop_footer
    %s18 = sadd.s32 1, %s14
  $region7: #{tpu_custom_call.1} parent=0 // loop_footer_branch
    %13 = sbr.rel target = $region3
  $region8: #{tpu_custom_call.1} parent=0 // loop_exit
    _

</llo_original>
